<compile_context>
chip_gen: v6e
topology: v6e:2x2x1
jax: 0.10.0
libtpu: 0.0.40
codegen_flags: <defaults>
</compile_context>

<pallas_src>
import functools

import jax
import jax.numpy as jnp
from jax.experimental import pallas as pl
from jax.experimental.pallas import tpu as pltpu


def _round_up(v: int, m: int) -> int:
    return (v + m - 1) // m * m


def _tpu_generation_params():
    """Returns (device_kind, x_block_cap_bytes, vmem_ceiling_bytes)."""
    kind = ""
    try:
        kind = jax.devices()[0].device_kind.lower()
    except Exception:
        pass
    vmem_phys = None
    try:
        vmem_phys = int(pltpu.get_tpu_info().vmem_capacity_bytes)
    except Exception:
        pass
    if "v5" in kind:
        # v5e: ~0.8 TB/s HBM (4-8 MiB blocks already amortize the ~0.35us step
        # overhead) but only a 16 MiB *default* scoped VMEM -> raise explicitly.
        cap, ceiling = 8 << 20, 96 << 20
    elif "v6" in kind:
        # v6e: 128 MiB physical VMEM -> large streaming blocks are safe here.
        cap, ceiling = 16 << 20, 96 << 20
    elif "7" in kind:
        # v7x: only 64 MiB VMEM per core -> ~10 MiB blocks, ~48 MiB scoped cap.
        cap, ceiling = 10 << 20, 48 << 20
    else:
        cap, ceiling = 8 << 20, 48 << 20
    if vmem_phys:
        ceiling = min(ceiling, vmem_phys * 3 // 4)
        cap = min(cap, max(ceiling // 4, 1 << 20))
    return kind, cap, ceiling


def _readout_kernel(x_ref, w_ref, b_ref, o_ref, acc_ref, *,
                    post_scale: float, bias_scale: float):
    # x_ref: (Bt, Nt, Din_pad)   w_ref: (Din_pad, Dout_pad) [pre-transposed]
    # b_ref: (1, Dout_pad)       o_ref: (Bt, Dout_pad)
    # acc_ref: (Bt, Din_pad) f32 scratch (running node-sum)
    nk = pl.program_id(1)

    @pl.when(nk == 0)
    def _():
        acc_ref[...] = jnp.zeros_like(acc_ref)

    # Streaming node-axis reduction; fused cast+reduce keeps the step cheap and
    # avoids materializing an f32 copy of the whole x block.
    acc_ref[...] += jnp.sum(x_ref[...], axis=1, dtype=jnp.float32)

    @pl.when(nk == pl.num_programs(1) - 1)
    def _():
        xs = acc_ref[...]                                   # (Bt, Din_pad) f32
        w = w_ref[...].astype(jnp.float32)                  # (Din_pad, Dout_pad)
        h = jax.lax.dot_general(
            xs, w, dimension_numbers=(((1,), (0,)), ((), ())),
            preferred_element_type=jnp.float32)             # (Bt, Dout_pad)
        if post_scale != 1.0:
            h = h * post_scale
        h = h + b_ref[...].astype(jnp.float32) * bias_scale
        o_ref[...] = jnp.maximum(h, 0.0).astype(o_ref.dtype)


def readout_forward(x, weight, bias, readout: str = "sum",
                    *, bt: int | None = None, nt: int | None = None):
    """x: (B, N, Din); weight: (Dout, Din) [PyTorch layout]; bias: (Dout,)."""
    B, N, Din = x.shape
    Dout = weight.shape[0]
    dtype = x.dtype
    itemsize = jnp.dtype(dtype).itemsize

    kind, x_block_cap, vmem_ceiling = _tpu_generation_params()

    # ---- lane-dense padding --------------------------------------------------
    Din_pad = _round_up(Din, 128)     # lane axis of x / acc and the MXU K dim
    Dout_pad = _round_up(Dout, 128)   # lane axis of weight / output stores

    # ---- batch tile ----------------------------------------------------------
    if bt is not None:
        Bt = _round_up(bt, 8)
        B_pad = _round_up(B, Bt)
    else:
        # Small N => the epilogue matmul is a visible fraction of the work, so
        # allow a taller Bt to fill the MXU M rows (128 on v5e, 256 on v6e/v7x).
        bt_cap = 64 if N > 64 else (128 if "v5" in kind else 256)
        Bt = min(_round_up(B, 8), bt_cap)
        B_pad = _round_up(B, Bt)
        # Megacore (v7x): keep the "parallel" batch axis at >= 2 steps when B
        # is large enough so both TensorCores get work.
        if B_pad // Bt < 2 and B_pad >= 16:
            Bt = max(8, _round_up(B_pad // 2, 8))
            B_pad = _round_up(B, Bt)

    # ---- node-axis tile: biggest x block within the generation's cap ----------
    bytes_per_node_row = max(Bt * Din_pad * itemsize, 1)
    if nt is None:
        nt = max(8, x_block_cap // bytes_per_node_row)
    Nt = min(_round_up(nt, 8), _round_up(N, 8))
    N_pad = _round_up(N, Nt)

    # ---- explicit VMEM budget (shrink Nt rather than let the compiler fail) ---
    w_bytes = Din_pad * Dout_pad * jnp.dtype(weight.dtype).itemsize
    b_bytes = Dout_pad * jnp.dtype(bias.dtype).itemsize
    out_blk_bytes = Bt * Dout_pad * itemsize
    acc_bytes = Bt * Din_pad * 4

    def _budget(nt_):
        x_blk = Bt * nt_ * Din_pad * itemsize
        # 2x x (double-buffered) + 2x weight/bias (worst case if the
        # single-buffer fallback is taken) + 2x out + acc scratch.
        return 2 * x_blk + 2 * (w_bytes + b_bytes) + 2 * out_blk_bytes + acc_bytes

    while _budget(Nt) > vmem_ceiling and Nt > 8:
        Nt = max(8, _round_up(Nt // 2, 8))
        N_pad = _round_up(N, Nt)
    # TODO(synk): for extreme Din*Dout the resident weight alone can exceed the
    # VMEM ceiling; that regime would need Dout/Din tiling of the epilogue.

    vmem_limit = int(min(vmem_ceiling,
                         max(_budget(Nt) * 5 // 4 + (2 << 20), 32 << 20)))

    # ---- pad inputs (zero rows/cols are inert for sum and matmul) -------------
    if B_pad != B or N_pad != N or Din_pad != Din:
        x = jnp.pad(x, ((0, B_pad - B), (0, N_pad - N), (0, Din_pad - Din)))
    # Pre-transpose once in XLA: (Dout, Din) -> (Din_pad, Dout_pad); lane-dense
    # on Dout_pad and MXU-native contraction in the kernel epilogue.
    w = jnp.pad(weight.T, ((0, Din_pad - Din), (0, Dout_pad - Dout)))
    b2 = jnp.pad(bias, ((0, Dout_pad - Dout),)).reshape(1, Dout_pad)

    # ---- mean/sum handled with the TRUE N --------------------------------------
    mean = (readout != "sum")
    post_scale = (1.0 / float(N)) if mean else 1.0
    bias_scale = 1.0 if mean else float(N)

    kernel = functools.partial(_readout_kernel,
                               post_scale=post_scale, bias_scale=bias_scale)

    # Advisory cost from the UN-padded problem size.
    flops = 2 * B * Din * Dout + B * N * Din
    bytes_accessed = (B * N * Din + Dout * Din + Dout + B * Dout) * itemsize
    cost = pl.CostEstimate(flops=flops, transcendentals=0,
                           bytes_accessed=bytes_accessed)

    def _build(single_buffer_params: bool):
        pm = dict(pipeline_mode=pl.Buffered(1)) if single_buffer_params else {}
        return pl.pallas_call(
            kernel,
            out_shape=jax.ShapeDtypeStruct((B_pad, Dout_pad), dtype),
            grid_spec=pltpu.PrefetchScalarGridSpec(
                num_scalar_prefetch=0,
                grid=(B_pad // Bt, N_pad // Nt),
                in_specs=[
                    # x: one (Bt, Nt, Din_pad) slab per step, streamed over N.
                    pl.BlockSpec((Bt, Nt, Din_pad), lambda i, k: (i, k, 0)),
                    # weight / bias: resident, constant index_map.
                    pl.BlockSpec((Din_pad, Dout_pad), lambda i, k: (0, 0), **pm),
                    pl.BlockSpec((1, Dout_pad), lambda i, k: (0, 0), **pm),
                ],
                # Output block constant across the N axis -> accumulator
                # pattern; (Bt, Dout_pad) is (8,128)-dense -> unmasked stores.
                out_specs=pl.BlockSpec((Bt, Dout_pad), lambda i, k: (i, 0)),
                scratch_shapes=[pltpu.VMEM((Bt, Din_pad), jnp.float32)],
            ),
            compiler_params=pltpu.CompilerParams(
                dimension_semantics=("parallel", "arbitrary"),
                vmem_limit_bytes=vmem_limit),
            cost_estimate=cost,
        )

    try:
        out_pad = _build(True)(x, w, b2)
    except Exception:
        # Installed Pallas may not accept pipeline_mode on BlockSpec; fall back
        # to default (double-buffered) weight/bias.
        out_pad = _build(False)(x, w, b2)

    return out_pad[:B, :Dout]


def _ref_impl(x, weight, bias, readout):
    # Pure-JAX reference with identical semantics to the PyTorch module.
    h = jnp.einsum("bnd,od->bno", x, weight) + bias
    r = h.sum(1) if readout == "sum" else h.mean(1)
    return jnp.maximum(r, 0.0)


if __name__ == "__main__":
    key = jax.random.PRNGKey(0)
    B, N, in_dim, out_dim = 2, 8, 32, 16
    k1, k2, k3 = jax.random.split(key, 3)

    x = jax.random.normal(k1, (B, N, in_dim), dtype=jnp.float32)
    # nn.Linear parameter shapes: weight (out_dim, in_dim), bias (out_dim,).
    bound = 1.0 / (in_dim ** 0.5)
    weight = jax.random.uniform(k2, (out_dim, in_dim), minval=-bound,
                                maxval=bound, dtype=jnp.float32)
    bias = jax.random.uniform(k3, (out_dim,), minval=-bound, maxval=bound,
                              dtype=jnp.float32)

    for mode in ("sum", "mean"):
        out = readout_forward(x, weight, bias, readout=mode)
        jax.block_until_ready(out)
        ref = _ref_impl(x, weight, bias, mode)
        assert out.shape == (B, out_dim), out.shape
        # reduce-before-matmul reassociates fp sums; allow a slightly looser tol
        assert jnp.allclose(out, ref, atol=1e-4, rtol=1e-4), f"mismatch for {mode}"

    print("KERNEL_OK")
</pallas_src>

<mosaic_0001>
module attributes {stable_mosaic.version = 11 : i64} {
  func.func @_readout_kernel(%arg0: i32, %arg1: i32, %arg2: memref<8x8x128xf32, #tpu.memory_space<vmem>>, %arg3: memref<128x128xf32, #tpu.memory_space<vmem>>, %arg4: memref<1x128xf32, #tpu.memory_space<vmem>>, %arg5: memref<8x128xf32, #tpu.memory_space<vmem>>, %arg6: memref<8x128xf32, #tpu.memory_space<vmem>>) attributes {dimension_semantics = [#tpu.dimension_semantics<parallel>, #tpu.dimension_semantics<arbitrary>], iteration_bounds = array<i64: 1, 1>, scalar_prefetch = 0 : i64, scratch_operands = 1 : i64, tpu.core_type = #tpu.core_type<tc>, window_params = [{transform_indices = @transform_0, window_bounds = array<i64: 8, 8, 128>}, {pipeline_mode = #tpu.pipeline_mode<synchronous>, transform_indices = @transform_1, window_bounds = array<i64: 128, 128>}, {pipeline_mode = #tpu.pipeline_mode<synchronous>, transform_indices = @transform_2, window_bounds = array<i64: 1, 128>}, {transform_indices = @transform_3, window_bounds = array<i64: 8, 128>}]} {
    %c0_i32 = arith.constant 0 : i32
    %0 = arith.cmpi eq, %arg1, %c0_i32 : i32
    %1 = arith.extui %0 : i1 to i32
    %c0_i32_0 = arith.constant 0 : i32
    %2 = arith.cmpi ne, %1, %c0_i32_0 : i32
    scf.if %2 {
      %cst_9 = arith.constant 0.000000e+00 : f32
      %11 = vector.broadcast %cst_9 : f32 to vector<8x128xf32>
      %c0_10 = arith.constant 0 : index
      %c0_11 = arith.constant 0 : index
      %12 = vector.load %arg6[%c0_10, %c0_11] : memref<8x128xf32, #tpu.memory_space<vmem>>, vector<8x128xf32>
      tpu.vector_store %arg6[%c0_10, %c0_11], %11 {strides = array<i32>} : memref<8x128xf32, #tpu.memory_space<vmem>>, vector<8x128xf32>,
    } else {
    }
    %c0 = arith.constant 0 : index
    %c0_1 = arith.constant 0 : index
    %3 = vector.load %arg6[%c0, %c0_1] : memref<8x128xf32, #tpu.memory_space<vmem>>, vector<8x128xf32>
    %c0_2 = arith.constant 0 : index
    %c0_3 = arith.constant 0 : index
    %c0_4 = arith.constant 0 : index
    %4 = vector.load %arg2[%c0_2, %c0_3, %c0_4] : memref<8x8x128xf32, #tpu.memory_space<vmem>>, vector<8x8x128xf32>
    %cst = arith.constant dense<0.000000e+00> : vector<8x128xf32>
    %5 = vector.multi_reduction <add>, %4, %cst [1] : vector<8x8x128xf32> to vector<8x128xf32>
    %6 = arith.addf %3, %5 : vector<8x128xf32>
    %c0_5 = arith.constant 0 : index
    %c0_6 = arith.constant 0 : index
    %7 = vector.load %arg6[%c0_5, %c0_6] : memref<8x128xf32, #tpu.memory_space<vmem>>, vector<8x128xf32>
    tpu.vector_store %arg6[%c0_5, %c0_6], %6 {strides = array<i32>} : memref<8x128xf32, #tpu.memory_space<vmem>>, vector<8x128xf32>,
    %c0_i32_7 = arith.constant 0 : i32
    %8 = arith.cmpi eq, %arg1, %c0_i32_7 : i32
    %9 = arith.extui %8 : i1 to i32
    %c0_i32_8 = arith.constant 0 : i32
    %10 = arith.cmpi ne, %9, %c0_i32_8 : i32
    scf.if %10 {
      %c0_9 = arith.constant 0 : index
      %c0_10 = arith.constant 0 : index
      %11 = vector.load %arg6[%c0_9, %c0_10] : memref<8x128xf32, #tpu.memory_space<vmem>>, vector<8x128xf32>
      %c0_11 = arith.constant 0 : index
      %c0_12 = arith.constant 0 : index
      %12 = vector.load %arg3[%c0_11, %c0_12] : memref<128x128xf32, #tpu.memory_space<vmem>>, vector<128x128xf32>
      %cst_13 = arith.constant dense<0.000000e+00> : vector<8x128xf32>
      %13 = tpu.matmul %11, %12, %cst_13 {dimension_numbers = #tpu.dot_dimension_numbers<[1], [0], [0], [1], [0, 0, 1, 1], [], []>} : vector<8x128xf32>, vector<128x128xf32>, vector<8x128xf32> -> vector<8x128xf32>
      %c0_14 = arith.constant 0 : index
      %c0_15 = arith.constant 0 : index
      %14 = vector.load %arg4[%c0_14, %c0_15] : memref<1x128xf32, #tpu.memory_space<vmem>>, vector<1x128xf32>
      %cst_16 = arith.constant 8.000000e+00 : f32
      %15 = vector.broadcast %cst_16 : f32 to vector<1x128xf32>
      %16 = arith.mulf %14, %15 : vector<1x128xf32>
      %17 = vector.broadcast %16 : vector<1x128xf32> to vector<8x128xf32>
      %18 = arith.addf %13, %17 : vector<8x128xf32>
      %cst_17 = arith.constant 0.000000e+00 : f32
      %19 = vector.broadcast %cst_17 : f32 to vector<8x128xf32>
      %20 = arith.maximumf %18, %19 : vector<8x128xf32>
      %c0_18 = arith.constant 0 : index
      %c0_19 = arith.constant 0 : index
      %21 = vector.load %arg5[%c0_18, %c0_19] : memref<8x128xf32, #tpu.memory_space<vmem>>, vector<8x128xf32>
      tpu.vector_store %arg5[%c0_18, %c0_19], %20 {strides = array<i32>} : memref<8x128xf32, #tpu.memory_space<vmem>>, vector<8x128xf32>,
    } else {
    }
    return
  }
  func.func @transform_0(%arg0: i32, %arg1: i32) -> (i32, i32, i32) {
    %c0_i32 = arith.constant 0 : i32
    %c0_i32_0 = arith.constant 0 : i32
    return %arg0, %arg1, %c0_i32 : i32, i32, i32
  }
  func.func @transform_1(%arg0: i32, %arg1: i32) -> (i32, i32) {
    %c0_i32 = arith.constant 0 : i32
    %c0_i32_0 = arith.constant 0 : i32
    %c0_i32_1 = arith.constant 0 : i32
    return %c0_i32, %c0_i32_0 : i32, i32
  }
  func.func @transform_2(%arg0: i32, %arg1: i32) -> (i32, i32) {
    %c0_i32 = arith.constant 0 : i32
    %c0_i32_0 = arith.constant 0 : i32
    %c0_i32_1 = arith.constant 0 : i32
    return %c0_i32, %c0_i32_0 : i32, i32
  }
  func.func @transform_3(%arg0: i32, %arg1: i32) -> (i32, i32) {
    %c0_i32 = arith.constant 0 : i32
    %c0_i32_0 = arith.constant 0 : i32
    return %arg0, %c0_i32 : i32, i32
  }
}

module attributes {stable_mosaic.version = 11 : i64} {
  func.func @_readout_kernel(%arg0: i32, %arg1: i32, %arg2: memref<8x8x128xf32, #tpu.memory_space<vmem>>, %arg3: memref<128x128xf32, #tpu.memory_space<vmem>>, %arg4: memref<1x128xf32, #tpu.memory_space<vmem>>, %arg5: memref<8x128xf32, #tpu.memory_space<vmem>>, %arg6: memref<8x128xf32, #tpu.memory_space<vmem>>) attributes {dimension_semantics = [#tpu.dimension_semantics<parallel>, #tpu.dimension_semantics<arbitrary>], iteration_bounds = array<i64: 1, 1>, scalar_prefetch = 0 : i64, scratch_operands = 1 : i64, tpu.core_type = #tpu.core_type<tc>, window_params = [{transform_indices = @transform_0, window_bounds = array<i64: 8, 8, 128>}, {pipeline_mode = #tpu.pipeline_mode<synchronous>, transform_indices = @transform_1, window_bounds = array<i64: 128, 128>}, {pipeline_mode = #tpu.pipeline_mode<synchronous>, transform_indices = @transform_2, window_bounds = array<i64: 1, 128>}, {transform_indices = @transform_3, window_bounds = array<i64: 8, 128>}]} {
    %c0_i32 = arith.constant 0 : i32
    %0 = arith.cmpi eq, %arg1, %c0_i32 : i32
    %1 = arith.extui %0 : i1 to i32
    %c0_i32_0 = arith.constant 0 : i32
    %2 = arith.cmpi ne, %1, %c0_i32_0 : i32
    scf.if %2 {
      %cst_9 = arith.constant 0.000000e+00 : f32
      %11 = vector.broadcast %cst_9 : f32 to vector<8x128xf32>
      %c0_10 = arith.constant 0 : index
      %c0_11 = arith.constant 0 : index
      %12 = vector.load %arg6[%c0_10, %c0_11] : memref<8x128xf32, #tpu.memory_space<vmem>>, vector<8x128xf32>
      tpu.vector_store %arg6[%c0_10, %c0_11], %11 {strides = array<i32>} : memref<8x128xf32, #tpu.memory_space<vmem>>, vector<8x128xf32>,
    } else {
    }
    %c0 = arith.constant 0 : index
    %c0_1 = arith.constant 0 : index
    %3 = vector.load %arg6[%c0, %c0_1] : memref<8x128xf32, #tpu.memory_space<vmem>>, vector<8x128xf32>
    %c0_2 = arith.constant 0 : index
    %c0_3 = arith.constant 0 : index
    %c0_4 = arith.constant 0 : index
    %4 = vector.load %arg2[%c0_2, %c0_3, %c0_4] : memref<8x8x128xf32, #tpu.memory_space<vmem>>, vector<8x8x128xf32>
    %cst = arith.constant dense<0.000000e+00> : vector<8x128xf32>
    %5 = vector.multi_reduction <add>, %4, %cst [1] : vector<8x8x128xf32> to vector<8x128xf32>
    %6 = arith.addf %3, %5 : vector<8x128xf32>
    %c0_5 = arith.constant 0 : index
    %c0_6 = arith.constant 0 : index
    %7 = vector.load %arg6[%c0_5, %c0_6] : memref<8x128xf32, #tpu.memory_space<vmem>>, vector<8x128xf32>
    tpu.vector_store %arg6[%c0_5, %c0_6], %6 {strides = array<i32>} : memref<8x128xf32, #tpu.memory_space<vmem>>, vector<8x128xf32>,
    %c0_i32_7 = arith.constant 0 : i32
    %8 = arith.cmpi eq, %arg1, %c0_i32_7 : i32
    %9 = arith.extui %8 : i1 to i32
    %c0_i32_8 = arith.constant 0 : i32
    %10 = arith.cmpi ne, %9, %c0_i32_8 : i32
    scf.if %10 {
      %c0_9 = arith.constant 0 : index
      %c0_10 = arith.constant 0 : index
      %11 = vector.load %arg6[%c0_9, %c0_10] : memref<8x128xf32, #tpu.memory_space<vmem>>, vector<8x128xf32>
      %c0_11 = arith.constant 0 : index
      %c0_12 = arith.constant 0 : index
      %12 = vector.load %arg3[%c0_11, %c0_12] : memref<128x128xf32, #tpu.memory_space<vmem>>, vector<128x128xf32>
      %cst_13 = arith.constant dense<0.000000e+00> : vector<8x128xf32>
      %13 = tpu.matmul %11, %12, %cst_13 {dimension_numbers = #tpu.dot_dimension_numbers<[1], [0], [0], [1], [0, 0, 1, 1], [], []>} : vector<8x128xf32>, vector<128x128xf32>, vector<8x128xf32> -> vector<8x128xf32>
      %c0_14 = arith.constant 0 : index
      %c0_15 = arith.constant 0 : index
      %14 = vector.load %arg4[%c0_14, %c0_15] : memref<1x128xf32, #tpu.memory_space<vmem>>, vector<1x128xf32>
      %cst_16 = arith.constant 8.000000e+00 : f32
      %15 = vector.broadcast %cst_16 : f32 to vector<1x128xf32>
      %16 = arith.mulf %14, %15 : vector<1x128xf32>
      %17 = vector.broadcast %16 : vector<1x128xf32> to vector<8x128xf32>
      %18 = arith.addf %13, %17 : vector<8x128xf32>
      %cst_17 = arith.constant 0.000000e+00 : f32
      %19 = vector.broadcast %cst_17 : f32 to vector<8x128xf32>
      %20 = arith.maximumf %18, %19 : vector<8x128xf32>
      %c0_18 = arith.constant 0 : index
      %c0_19 = arith.constant 0 : index
      %21 = vector.load %arg5[%c0_18, %c0_19] : memref<8x128xf32, #tpu.memory_space<vmem>>, vector<8x128xf32>
      tpu.vector_store %arg5[%c0_18, %c0_19], %20 {strides = array<i32>} : memref<8x128xf32, #tpu.memory_space<vmem>>, vector<8x128xf32>,
    } else {
    }
    return
  }
  func.func @transform_0(%arg0: i32, %arg1: i32) -> (i32, i32, i32) {
    %c0_i32 = arith.constant 0 : i32
    %c0_i32_0 = arith.constant 0 : i32
    return %arg0, %arg1, %c0_i32 : i32, i32, i32
  }
  func.func @transform_1(%arg0: i32, %arg1: i32) -> (i32, i32) {
    %c0_i32 = arith.constant 0 : i32
    %c0_i32_0 = arith.constant 0 : i32
    %c0_i32_1 = arith.constant 0 : i32
    return %c0_i32, %c0_i32_0 : i32, i32
  }
  func.func @transform_2(%arg0: i32, %arg1: i32) -> (i32, i32) {
    %c0_i32 = arith.constant 0 : i32
    %c0_i32_0 = arith.constant 0 : i32
    %c0_i32_1 = arith.constant 0 : i32
    return %c0_i32, %c0_i32_0 : i32, i32
  }
  func.func @transform_3(%arg0: i32, %arg1: i32) -> (i32, i32) {
    %c0_i32 = arith.constant 0 : i32
    %c0_i32_0 = arith.constant 0 : i32
    return %arg0, %c0_i32 : i32, i32
  }
}

</mosaic_0001>

<llo_original>
// kernel: tpu_custom_call.1
$region0: #{tpu_custom_call.1}
  #allocation0 [shape = 'u32[]', space=smem, size = 0x4, offset = 0x4, fixed_abs, tag = 'smem constant byte address 0x4 - core index']
  #allocation1 [shape = 'u32[144,128]{1,0:T(1,128)}', space=vmem, size = 0x12000, scoped, tag = 'internal scratch']
  #allocation2 [shape = 'f32[8,128]{1,0:T(8,128)}', space=vmem, size = 0x1000, scoped, tag = 'scratch operand']
  %s0 = inlined_call_operand.hbm [shape: f32[8,8,128], index: 0, kind: input, shape index: {}]
  %s1 = inlined_call_operand.hbm [shape: f32[128,128], index: 1, kind: input, shape index: {}]
  %s2 = inlined_call_operand.vmem [shape: f32[1,128], index: 2, kind: input, shape index: {}]
  %s3 = inlined_call_operand.hbm [shape: f32[8,128], index: 3, kind: output, shape index: {}]
  %s4 = sld [smem:[#allocation0]]
  $region38: #{tpu_custom_call.1} parent=0
    _
  %s6 = ssub.s32 1, %s4
  %s7 = scalar_select 0, %s6, %s4
  $region1: #{tpu_custom_call.1} parent=0
    #allocation3 [shape = 'u8[32768]{0}', space=vmem, size = 0x8000, scoped, tag = 'input window, operand 0, single buffered']
    #allocation4 [shape = 's32[1]{0}', space=sflag, size = 0x4, scoped, tag = 'scoped memory for tpu_custom_call.1']
    #allocation5 [shape = 's32[1]{0}', space=sflag, size = 0x4, scoped, tag = 'scoped memory for tpu_custom_call.1']
    #allocation6 [shape = 'u8[65536]{0}', space=vmem, size = 0x10000, scoped, tag = 'input window, operand 1, single buffered']
    #allocation7 [shape = 's32[1]{0}', space=sflag, size = 0x4, scoped, tag = 'scoped memory for tpu_custom_call.1']
    #allocation8 [shape = 'u8[4096]{0}', space=vmem, size = 0x1000, scoped, tag = 'output window, operand 0, single buffered']
    %8 = vsyncpa [#allocation4], 0
    %9 = vsyncpa [#allocation7], 0
    %10 = vsyncpa [#allocation5], 0
    // Predicated region
    $region2: #{tpu_custom_call.1} parent=1 // pred_check
      _
    $region3: #{tpu_custom_call.1} parent=1 // pred_check_branch
      %12 = sbr.rel (0) target = $region5
    $region4: #{tpu_custom_call.1} parent=1 // pred_region
      %s14 = ssub.s32 1024, 1024
      %15 = vsyncadd [#allocation4], %s14
      %s16 = sshll.u32 [#allocation3], 4
      %s17 = int_to_ptr.vmem [resolvable:$true] %s16
      %22 = dma.hbm_to_vmem [thread:$0]  %s0, 1024, %s17, [#allocation4], 128, 128, 8
    $region5: #{tpu_custom_call.1} parent=1 // pred_fallthru
      _
    // Predicated region
    $region6: #{tpu_custom_call.1} parent=1 // pred_check
      _
    $region7: #{tpu_custom_call.1} parent=1 // pred_check_branch
      %24 = sbr.rel (0) target = $region9
    $region8: #{tpu_custom_call.1} parent=1 // pred_region
      %s26 = ssub.s32 2048, 2048
      %27 = vsyncadd [#allocation7], %s26
      %s28 = sshll.u32 [#allocation6], 4
      %s29 = int_to_ptr.vmem [resolvable:$true] %s28
      %34 = dma.hbm_to_vmem [thread:$0]  %s1, 2048, %s29, [#allocation7], 128, 128, 8
    $region9: #{tpu_custom_call.1} parent=1 // pred_fallthru
      _
    // Predicated region
    $region10: #{tpu_custom_call.1} parent=1 // pred_check
      _
    $region11: #{tpu_custom_call.1} parent=1 // pred_check_branch
      %36 = sbr.rel (0) target = $region13
    $region12: #{tpu_custom_call.1} parent=1 // pred_region
      _
    $region13: #{tpu_custom_call.1} parent=1 // pred_fallthru
      _
    // Predicated region
    $region14: #{tpu_custom_call.1} parent=1 // pred_check
      _
    $region15: #{tpu_custom_call.1} parent=1 // pred_check_branch
      %38 = sbr.rel (0) target = $region17
    $region16: #{tpu_custom_call.1} parent=1 // pred_region
      %39 = dma.done [#allocation4], 1024
    $region17: #{tpu_custom_call.1} parent=1 // pred_fallthru
      _
    // Predicated region
    $region18: #{tpu_custom_call.1} parent=1 // pred_check
      _
    $region19: #{tpu_custom_call.1} parent=1 // pred_check_branch
      %41 = sbr.rel (0) target = $region21
    $region20: #{tpu_custom_call.1} parent=1 // pred_region
      %42 = dma.done [#allocation7], 2048
    $region21: #{tpu_custom_call.1} parent=1 // pred_fallthru
      _
    %p43 = scmp.eq.s32.totalorder 0, 0
    // Predicated region
    $region22: #{tpu_custom_call.1} parent=1 // pred_check
      %p44 = pneg %p43
    $region23: #{tpu_custom_call.1} parent=1 // pred_check_branch
      %46 = sbr.rel (%p44) target = $region25
    $region24: #{tpu_custom_call.1} parent=1 // pred_region
      %47 = vst [vmem:[#allocation2] sm:$0xff] 0.0
    $region25: #{tpu_custom_call.1} parent=1 // pred_fallthru
      _
    %v48 = vld [vmem:[#allocation2] sm:$0xff]
    %v49 = vld [vmem:[#allocation3] sm:$0xff]
    %v50 = vld [vmem:[#allocation3 + $0x8] sm:$0xff]
    %v51 = vld [vmem:[#allocation3 + $0x10] sm:$0xff]
    %v52 = vld [vmem:[#allocation3 + $0x18] sm:$0xff]
    %v53 = vld [vmem:[#allocation3 + $0x20] sm:$0xff]
    %v54 = vld [vmem:[#allocation3 + $0x28] sm:$0xff]
    %v55 = vld [vmem:[#allocation3 + $0x30] sm:$0xff]
    %v56 = vld [vmem:[#allocation3 + $0x38] sm:$0xff]
    %v57 = vrot.slane %v49, 4
    %v58 = vadd.f32 %v49, %v57
    %v59 = vrot.slane %v58, 2
    %v60 = vadd.f32 %v58, %v59
    %v61 = vrot.slane %v60, 1
    %v62 = vadd.f32 %v60, %v61
    %v63 = vrot.slane %v50, 4
    %v64 = vadd.f32 %v50, %v63
    %v65 = vrot.slane %v64, 2
    %v66 = vadd.f32 %v64, %v65
    %v67 = vrot.slane %v66, 1
    %v68 = vadd.f32 %v66, %v67
    %v69 = vrot.slane %v51, 4
    %v70 = vadd.f32 %v51, %v69
    %v71 = vrot.slane %v70, 2
    %v72 = vadd.f32 %v70, %v71
    %v73 = vrot.slane %v72, 1
    %v74 = vadd.f32 %v72, %v73
    %v75 = vrot.slane %v52, 4
    %v76 = vadd.f32 %v52, %v75
    %v77 = vrot.slane %v76, 2
    %v78 = vadd.f32 %v76, %v77
    %v79 = vrot.slane %v78, 1
    %v80 = vadd.f32 %v78, %v79
    %v81 = vrot.slane %v53, 4
    %v82 = vadd.f32 %v53, %v81
    %v83 = vrot.slane %v82, 2
    %v84 = vadd.f32 %v82, %v83
    %v85 = vrot.slane %v84, 1
    %v86 = vadd.f32 %v84, %v85
    %v87 = vrot.slane %v54, 4
    %v88 = vadd.f32 %v54, %v87
    %v89 = vrot.slane %v88, 2
    %v90 = vadd.f32 %v88, %v89
    %v91 = vrot.slane %v90, 1
    %v92 = vadd.f32 %v90, %v91
    %v93 = vrot.slane %v55, 4
    %v94 = vadd.f32 %v55, %v93
    %v95 = vrot.slane %v94, 2
    %v96 = vadd.f32 %v94, %v95
    %v97 = vrot.slane %v96, 1
    %v98 = vadd.f32 %v96, %v97
    %v99 = vrot.slane %v56, 4
    %v100 = vadd.f32 %v56, %v99
    %v101 = vrot.slane %v100, 2
    %v102 = vadd.f32 %v100, %v101
    %v103 = vrot.slane %v102, 1
    %v104 = vadd.f32 %v102, %v103
    %vm113 = vcmask 1041409
    %v114 = vsel %vm113, %v68, %v62
    %vm115 = vcmask 1042434
    %v116 = vsel %vm115, %v74, %v114
    %vm117 = vcmask 1043459
    %v118 = vsel %vm117, %v80, %v116
    %vm119 = vcmask 1044484
    %v120 = vsel %vm119, %v86, %v118
    %vm121 = vcmask 1045509
    %v122 = vsel %vm121, %v92, %v120
    %vm123 = vcmask 1046534
    %v124 = vsel %vm123, %v98, %v122
    %vm125 = vcmask 1047559
    %v126 = vsel %vm125, %v104, %v124
    %v128 = vadd.f32 %v48, %v126
    %129 = vst [vmem:[#allocation2] sm:$0xff] %v128
    // Predicated region
    $region26: #{tpu_custom_call.1} parent=1 // pred_check
      %p130 = pneg %p43
    $region27: #{tpu_custom_call.1} parent=1 // pred_check_branch
      %132 = sbr.rel (%p130) target = $region29
    $region28: #{tpu_custom_call.1} parent=1 // pred_region
      %v133 = vld [vmem:[#allocation2] sm:$0xff]
      %v134 = vld [vmem:[#allocation6] sm:$0xff]
      %v135 = vld [vmem:[#allocation6 + $0x8] sm:$0xff]
      %v136 = vld [vmem:[#allocation6 + $0x10] sm:$0xff]
      %v137 = vld [vmem:[#allocation6 + $0x18] sm:$0xff]
      %v138 = vld [vmem:[#allocation6 + $0x20] sm:$0xff]
      %v139 = vld [vmem:[#allocation6 + $0x28] sm:$0xff]
      %v140 = vld [vmem:[#allocation6 + $0x30] sm:$0xff]
      %v141 = vld [vmem:[#allocation6 + $0x38] sm:$0xff]
      %v142 = vld [vmem:[#allocation6 + $0x40] sm:$0xff]
      %v143 = vld [vmem:[#allocation6 + $0x48] sm:$0xff]
      %v144 = vld [vmem:[#allocation6 + $0x50] sm:$0xff]
      %v145 = vld [vmem:[#allocation6 + $0x58] sm:$0xff]
      %v146 = vld [vmem:[#allocation6 + $0x60] sm:$0xff]
      %v147 = vld [vmem:[#allocation6 + $0x68] sm:$0xff]
      %v148 = vld [vmem:[#allocation6 + $0x70] sm:$0xff]
      %v149 = vld [vmem:[#allocation6 + $0x78] sm:$0xff]
      %v150 = vld [vmem:[%s2] sm:$0x1]
      %v151 = vmul.f32 %v150, 8.0
      %v153 = vlaneseq
      %v154 = vshrl.u32 %v153, 7
      %v155 = vsub.s32 0, %v154
      %v156 = vrot.slane %v151, %v155
      %158 = vmatprep.subr.mxu0 0.0
      %159 = vmatpush1.msra.mxu0 %v149
      %160 = vmatprep.subr.mxu0 0.0
      %161 = vmatpush1.msra.mxu0 %v148
      %162 = vmatprep.subr.mxu0 0.0
      %163 = vmatpush1.msra.mxu0 %v147
      %164 = vmatprep.subr.mxu0 0.0
      %165 = vmatpush1.msra.mxu0 %v146
      %166 = vmatprep.subr.mxu0 0.0
      %167 = vmatpush1.msra.mxu0 %v145
      %168 = vmatprep.subr.mxu0 0.0
      %169 = vmatpush1.msra.mxu0 %v144
      %170 = vmatprep.subr.mxu0 0.0
      %171 = vmatpush1.msra.mxu0 %v143
      %172 = vmatprep.subr.mxu0 0.0
      %173 = vmatpush1.msra.mxu0 %v142
      %174 = vmatprep.subr.mxu0 0.0
      %175 = vmatpush1.msra.mxu0 %v141
      %176 = vmatprep.subr.mxu0 0.0
      %177 = vmatpush1.msra.mxu0 %v140
      %178 = vmatprep.subr.mxu0 0.0
      %179 = vmatpush1.msra.mxu0 %v139
      %180 = vmatprep.subr.mxu0 0.0
      %181 = vmatpush1.msra.mxu0 %v138
      %182 = vmatprep.subr.mxu0 0.0
      %183 = vmatpush1.msra.mxu0 %v137
      %184 = vmatprep.subr.mxu0 0.0
      %185 = vmatpush1.msra.mxu0 %v136
      %186 = vmatprep.subr.mxu0 0.0
      %187 = vmatpush1.msra.mxu0 %v135
      %188 = vmatprep.subr.mxu0 0.0
      %189 = vmatpush1.msra.mxu0 %v134
      %190 = vmatprep.subr.mxu0 0.0
      %191 = vmatpush2.msra.mxu0 0.0
      %192 = vmatprep.subr.mxu0 0.0
      %193 = vmatpush2.msra.mxu0 0.0
      %194 = vmatprep.subr.mxu0 0.0
      %195 = vmatpush2.msra.mxu0 0.0
      %196 = vmatprep.subr.mxu0 0.0
      %197 = vmatpush2.msra.mxu0 0.0
      %198 = vmatprep.subr.mxu0 0.0
      %199 = vmatpush2.msra.mxu0 0.0
      %200 = vmatprep.subr.mxu0 0.0
      %201 = vmatpush2.msra.mxu0 0.0
      %202 = vmatprep.subr.mxu0 0.0
      %203 = vmatpush2.msra.mxu0 0.0
      %204 = vmatprep.subr.mxu0 0.0
      %205 = vmatpush2.msra.mxu0 0.0
      %206 = vmatprep.subr.mxu0 0.0
      %207 = vmatpush2.msra.mxu0 0.0
      %208 = vmatprep.subr.mxu0 0.0
      %209 = vmatpush2.msra.mxu0 0.0
      %210 = vmatprep.subr.mxu0 0.0
      %211 = vmatpush2.msra.mxu0 0.0
      %212 = vmatprep.subr.mxu0 0.0
      %213 = vmatpush2.msra.mxu0 0.0
      %214 = vmatprep.subr.mxu0 0.0
      %215 = vmatpush2.msra.mxu0 0.0
      %216 = vmatprep.subr.mxu0 0.0
      %217 = vmatpush2.msra.mxu0 0.0
      %218 = vmatprep.subr.mxu0 0.0
      %219 = vmatpush2.msra.mxu0 0.0
      %220 = vmatprep.subr.mxu0 0.0
      %221 = vmatpush2.msra.mxu0 0.0
      %222 = vmatprep.mubr.f32.mxu0 0.0
      %223 = vmatmul.mubr.f32.gmra.mxu0 %v133
      %v224 = vpop.f32.mrf.mxu0
      %v225 = vadd.f32 %v156, %v224
      %v226 = vpop.f32.mrf.mxu0
      %227 = vdwg.mxu0
      %v228 = vmax.f32 %v225, 0.0
      %229 = vst [vmem:[#allocation8] sm:$0xff] %v228
    $region29: #{tpu_custom_call.1} parent=1 // pred_fallthru
      _
    // Predicated region
    $region30: #{tpu_custom_call.1} parent=1 // pred_check
      _
    $region31: #{tpu_custom_call.1} parent=1 // pred_check_branch
      %231 = sbr.rel (0) target = $region33
    $region32: #{tpu_custom_call.1} parent=1 // pred_region
      %s233 = ssub.s32 128, 128
      %234 = vsyncadd [#allocation5], %s233
      %s236 = sshll.u32 [#allocation8], 4
      %s237 = int_to_ptr.vmem [resolvable:$true] %s236
      %239 = dma.vmem_to_hbm [thread:$0]  %s237, 128, %s3, [#allocation5]
    $region33: #{tpu_custom_call.1} parent=1 // pred_fallthru
      _
    // Predicated region
    $region34: #{tpu_custom_call.1} parent=1 // pred_check
      _
    $region35: #{tpu_custom_call.1} parent=1 // pred_check_branch
      %241 = sbr.rel (0) target = $region37
    $region36: #{tpu_custom_call.1} parent=1 // pred_region
      %242 = dma.done [#allocation5], 128
    $region37: #{tpu_custom_call.1} parent=1 // pred_fallthru
      _
    %243 = vsyncpa [#allocation4], 1
    %244 = vsyncpa [#allocation7], 1
    %245 = vsyncpa [#allocation5], 1

// kernel: tpu_custom_call.1
$region0: #{tpu_custom_call.1}
  #allocation0 [shape = 'u32[]', space=smem, size = 0x4, offset = 0x4, fixed_abs, tag = 'smem constant byte address 0x4 - core index']
  #allocation1 [shape = 'u32[144,128]{1,0:T(1,128)}', space=vmem, size = 0x12000, scoped, tag = 'internal scratch']
  #allocation2 [shape = 'f32[8,128]{1,0:T(8,128)}', space=vmem, size = 0x1000, scoped, tag = 'scratch operand']
  %s0 = inlined_call_operand.hbm [shape: f32[8,8,128], index: 0, kind: input, shape index: {}]
  %s1 = inlined_call_operand.hbm [shape: f32[128,128], index: 1, kind: input, shape index: {}]
  %s2 = inlined_call_operand.vmem [shape: f32[1,128], index: 2, kind: input, shape index: {}]
  %s3 = inlined_call_operand.hbm [shape: f32[8,128], index: 3, kind: output, shape index: {}]
  %s4 = sld [smem:[#allocation0]]
  $region38: #{tpu_custom_call.1} parent=0
    _
  %s6 = ssub.s32 1, %s4
  %s7 = scalar_select 0, %s6, %s4
  $region1: #{tpu_custom_call.1} parent=0
    #allocation3 [shape = 'u8[32768]{0}', space=vmem, size = 0x8000, scoped, tag = 'input window, operand 0, single buffered']
    #allocation4 [shape = 's32[1]{0}', space=sflag, size = 0x4, scoped, tag = 'scoped memory for tpu_custom_call.1']
    #allocation5 [shape = 's32[1]{0}', space=sflag, size = 0x4, scoped, tag = 'scoped memory for tpu_custom_call.1']
    #allocation6 [shape = 'u8[65536]{0}', space=vmem, size = 0x10000, scoped, tag = 'input window, operand 1, single buffered']
    #allocation7 [shape = 's32[1]{0}', space=sflag, size = 0x4, scoped, tag = 'scoped memory for tpu_custom_call.1']
    #allocation8 [shape = 'u8[4096]{0}', space=vmem, size = 0x1000, scoped, tag = 'output window, operand 0, single buffered']
    %8 = vsyncpa [#allocation4], 0
    %9 = vsyncpa [#allocation7], 0
    %10 = vsyncpa [#allocation5], 0
    // Predicated region
    $region2: #{tpu_custom_call.1} parent=1 // pred_check
      _
    $region3: #{tpu_custom_call.1} parent=1 // pred_check_branch
      %12 = sbr.rel (0) target = $region5
    $region4: #{tpu_custom_call.1} parent=1 // pred_region
      %s14 = ssub.s32 1024, 1024
      %15 = vsyncadd [#allocation4], %s14
      %s16 = sshll.u32 [#allocation3], 4
      %s17 = int_to_ptr.vmem [resolvable:$true] %s16
      %22 = dma.hbm_to_vmem [thread:$0]  %s0, 1024, %s17, [#allocation4], 128, 128, 8
    $region5: #{tpu_custom_call.1} parent=1 // pred_fallthru
      _
    // Predicated region
    $region6: #{tpu_custom_call.1} parent=1 // pred_check
      _
    $region7: #{tpu_custom_call.1} parent=1 // pred_check_branch
      %24 = sbr.rel (0) target = $region9
    $region8: #{tpu_custom_call.1} parent=1 // pred_region
      %s26 = ssub.s32 2048, 2048
      %27 = vsyncadd [#allocation7], %s26
      %s28 = sshll.u32 [#allocation6], 4
      %s29 = int_to_ptr.vmem [resolvable:$true] %s28
      %34 = dma.hbm_to_vmem [thread:$0]  %s1, 2048, %s29, [#allocation7], 128, 128, 8
    $region9: #{tpu_custom_call.1} parent=1 // pred_fallthru
      _
    // Predicated region
    $region10: #{tpu_custom_call.1} parent=1 // pred_check
      _
    $region11: #{tpu_custom_call.1} parent=1 // pred_check_branch
      %36 = sbr.rel (0) target = $region13
    $region12: #{tpu_custom_call.1} parent=1 // pred_region
      _
    $region13: #{tpu_custom_call.1} parent=1 // pred_fallthru
      _
    // Predicated region
    $region14: #{tpu_custom_call.1} parent=1 // pred_check
      _
    $region15: #{tpu_custom_call.1} parent=1 // pred_check_branch
      %38 = sbr.rel (0) target = $region17
    $region16: #{tpu_custom_call.1} parent=1 // pred_region
      %39 = dma.done [#allocation4], 1024
    $region17: #{tpu_custom_call.1} parent=1 // pred_fallthru
      _
    // Predicated region
    $region18: #{tpu_custom_call.1} parent=1 // pred_check
      _
    $region19: #{tpu_custom_call.1} parent=1 // pred_check_branch
      %41 = sbr.rel (0) target = $region21
    $region20: #{tpu_custom_call.1} parent=1 // pred_region
      %42 = dma.done [#allocation7], 2048
    $region21: #{tpu_custom_call.1} parent=1 // pred_fallthru
      _
    %p43 = scmp.eq.s32.totalorder 0, 0
    // Predicated region
    $region22: #{tpu_custom_call.1} parent=1 // pred_check
      %p44 = pneg %p43
    $region23: #{tpu_custom_call.1} parent=1 // pred_check_branch
      %46 = sbr.rel (%p44) target = $region25
    $region24: #{tpu_custom_call.1} parent=1 // pred_region
      %47 = vst [vmem:[#allocation2] sm:$0xff] 0.0
    $region25: #{tpu_custom_call.1} parent=1 // pred_fallthru
      _
    %v48 = vld [vmem:[#allocation2] sm:$0xff]
    %v49 = vld [vmem:[#allocation3] sm:$0xff]
    %v50 = vld [vmem:[#allocation3 + $0x8] sm:$0xff]
    %v51 = vld [vmem:[#allocation3 + $0x10] sm:$0xff]
    %v52 = vld [vmem:[#allocation3 + $0x18] sm:$0xff]
    %v53 = vld [vmem:[#allocation3 + $0x20] sm:$0xff]
    %v54 = vld [vmem:[#allocation3 + $0x28] sm:$0xff]
    %v55 = vld [vmem:[#allocation3 + $0x30] sm:$0xff]
    %v56 = vld [vmem:[#allocation3 + $0x38] sm:$0xff]
    %v57 = vrot.slane %v49, 4
    %v58 = vadd.f32 %v49, %v57
    %v59 = vrot.slane %v58, 2
    %v60 = vadd.f32 %v58, %v59
    %v61 = vrot.slane %v60, 1
    %v62 = vadd.f32 %v60, %v61
    %v63 = vrot.slane %v50, 4
    %v64 = vadd.f32 %v50, %v63
    %v65 = vrot.slane %v64, 2
    %v66 = vadd.f32 %v64, %v65
    %v67 = vrot.slane %v66, 1
    %v68 = vadd.f32 %v66, %v67
    %v69 = vrot.slane %v51, 4
    %v70 = vadd.f32 %v51, %v69
    %v71 = vrot.slane %v70, 2
    %v72 = vadd.f32 %v70, %v71
    %v73 = vrot.slane %v72, 1
    %v74 = vadd.f32 %v72, %v73
    %v75 = vrot.slane %v52, 4
    %v76 = vadd.f32 %v52, %v75
    %v77 = vrot.slane %v76, 2
    %v78 = vadd.f32 %v76, %v77
    %v79 = vrot.slane %v78, 1
    %v80 = vadd.f32 %v78, %v79
    %v81 = vrot.slane %v53, 4
    %v82 = vadd.f32 %v53, %v81
    %v83 = vrot.slane %v82, 2
    %v84 = vadd.f32 %v82, %v83
    %v85 = vrot.slane %v84, 1
    %v86 = vadd.f32 %v84, %v85
    %v87 = vrot.slane %v54, 4
    %v88 = vadd.f32 %v54, %v87
    %v89 = vrot.slane %v88, 2
    %v90 = vadd.f32 %v88, %v89
    %v91 = vrot.slane %v90, 1
    %v92 = vadd.f32 %v90, %v91
    %v93 = vrot.slane %v55, 4
    %v94 = vadd.f32 %v55, %v93
    %v95 = vrot.slane %v94, 2
    %v96 = vadd.f32 %v94, %v95
    %v97 = vrot.slane %v96, 1
    %v98 = vadd.f32 %v96, %v97
    %v99 = vrot.slane %v56, 4
    %v100 = vadd.f32 %v56, %v99
    %v101 = vrot.slane %v100, 2
    %v102 = vadd.f32 %v100, %v101
    %v103 = vrot.slane %v102, 1
    %v104 = vadd.f32 %v102, %v103
    %vm113 = vcmask 1041409
    %v114 = vsel %vm113, %v68, %v62
    %vm115 = vcmask 1042434
    %v116 = vsel %vm115, %v74, %v114
    %vm117 = vcmask 1043459
    %v118 = vsel %vm117, %v80, %v116
    %vm119 = vcmask 1044484
    %v120 = vsel %vm119, %v86, %v118
    %vm121 = vcmask 1045509
    %v122 = vsel %vm121, %v92, %v120
    %vm123 = vcmask 1046534
    %v124 = vsel %vm123, %v98, %v122
    %vm125 = vcmask 1047559
    %v126 = vsel %vm125, %v104, %v124
    %v128 = vadd.f32 %v48, %v126
    %129 = vst [vmem:[#allocation2] sm:$0xff] %v128
    // Predicated region
    $region26: #{tpu_custom_call.1} parent=1 // pred_check
      %p130 = pneg %p43
    $region27: #{tpu_custom_call.1} parent=1 // pred_check_branch
      %132 = sbr.rel (%p130) target = $region29
    $region28: #{tpu_custom_call.1} parent=1 // pred_region
      %v133 = vld [vmem:[#allocation2] sm:$0xff]
      %v134 = vld [vmem:[#allocation6] sm:$0xff]
      %v135 = vld [vmem:[#allocation6 + $0x8] sm:$0xff]
      %v136 = vld [vmem:[#allocation6 + $0x10] sm:$0xff]
      %v137 = vld [vmem:[#allocation6 + $0x18] sm:$0xff]
      %v138 = vld [vmem:[#allocation6 + $0x20] sm:$0xff]
      %v139 = vld [vmem:[#allocation6 + $0x28] sm:$0xff]
      %v140 = vld [vmem:[#allocation6 + $0x30] sm:$0xff]
      %v141 = vld [vmem:[#allocation6 + $0x38] sm:$0xff]
      %v142 = vld [vmem:[#allocation6 + $0x40] sm:$0xff]
      %v143 = vld [vmem:[#allocation6 + $0x48] sm:$0xff]
      %v144 = vld [vmem:[#allocation6 + $0x50] sm:$0xff]
      %v145 = vld [vmem:[#allocation6 + $0x58] sm:$0xff]
      %v146 = vld [vmem:[#allocation6 + $0x60] sm:$0xff]
      %v147 = vld [vmem:[#allocation6 + $0x68] sm:$0xff]
      %v148 = vld [vmem:[#allocation6 + $0x70] sm:$0xff]
      %v149 = vld [vmem:[#allocation6 + $0x78] sm:$0xff]
      %v150 = vld [vmem:[%s2] sm:$0x1]
      %v151 = vmul.f32 %v150, 8.0
      %v153 = vlaneseq
      %v154 = vshrl.u32 %v153, 7
      %v155 = vsub.s32 0, %v154
      %v156 = vrot.slane %v151, %v155
      %158 = vmatprep.subr.mxu0 0.0
      %159 = vmatpush1.msra.mxu0 %v149
      %160 = vmatprep.subr.mxu0 0.0
      %161 = vmatpush1.msra.mxu0 %v148
      %162 = vmatprep.subr.mxu0 0.0
      %163 = vmatpush1.msra.mxu0 %v147
      %164 = vmatprep.subr.mxu0 0.0
      %165 = vmatpush1.msra.mxu0 %v146
      %166 = vmatprep.subr.mxu0 0.0
      %167 = vmatpush1.msra.mxu0 %v145
      %168 = vmatprep.subr.mxu0 0.0
      %169 = vmatpush1.msra.mxu0 %v144
      %170 = vmatprep.subr.mxu0 0.0
      %171 = vmatpush1.msra.mxu0 %v143
      %172 = vmatprep.subr.mxu0 0.0
      %173 = vmatpush1.msra.mxu0 %v142
      %174 = vmatprep.subr.mxu0 0.0
      %175 = vmatpush1.msra.mxu0 %v141
      %176 = vmatprep.subr.mxu0 0.0
      %177 = vmatpush1.msra.mxu0 %v140
      %178 = vmatprep.subr.mxu0 0.0
      %179 = vmatpush1.msra.mxu0 %v139
      %180 = vmatprep.subr.mxu0 0.0
      %181 = vmatpush1.msra.mxu0 %v138
      %182 = vmatprep.subr.mxu0 0.0
      %183 = vmatpush1.msra.mxu0 %v137
      %184 = vmatprep.subr.mxu0 0.0
      %185 = vmatpush1.msra.mxu0 %v136
      %186 = vmatprep.subr.mxu0 0.0
      %187 = vmatpush1.msra.mxu0 %v135
      %188 = vmatprep.subr.mxu0 0.0
      %189 = vmatpush1.msra.mxu0 %v134
      %190 = vmatprep.subr.mxu0 0.0
      %191 = vmatpush2.msra.mxu0 0.0
      %192 = vmatprep.subr.mxu0 0.0
      %193 = vmatpush2.msra.mxu0 0.0
      %194 = vmatprep.subr.mxu0 0.0
      %195 = vmatpush2.msra.mxu0 0.0
      %196 = vmatprep.subr.mxu0 0.0
      %197 = vmatpush2.msra.mxu0 0.0
      %198 = vmatprep.subr.mxu0 0.0
      %199 = vmatpush2.msra.mxu0 0.0
      %200 = vmatprep.subr.mxu0 0.0
      %201 = vmatpush2.msra.mxu0 0.0
      %202 = vmatprep.subr.mxu0 0.0
      %203 = vmatpush2.msra.mxu0 0.0
      %204 = vmatprep.subr.mxu0 0.0
      %205 = vmatpush2.msra.mxu0 0.0
      %206 = vmatprep.subr.mxu0 0.0
      %207 = vmatpush2.msra.mxu0 0.0
      %208 = vmatprep.subr.mxu0 0.0
      %209 = vmatpush2.msra.mxu0 0.0
      %210 = vmatprep.subr.mxu0 0.0
      %211 = vmatpush2.msra.mxu0 0.0
      %212 = vmatprep.subr.mxu0 0.0
      %213 = vmatpush2.msra.mxu0 0.0
      %214 = vmatprep.subr.mxu0 0.0
      %215 = vmatpush2.msra.mxu0 0.0
      %216 = vmatprep.subr.mxu0 0.0
      %217 = vmatpush2.msra.mxu0 0.0
      %218 = vmatprep.subr.mxu0 0.0
      %219 = vmatpush2.msra.mxu0 0.0
      %220 = vmatprep.subr.mxu0 0.0
      %221 = vmatpush2.msra.mxu0 0.0
      %222 = vmatprep.mubr.f32.mxu0 0.0
      %223 = vmatmul.mubr.f32.gmra.mxu0 %v133
      %v224 = vpop.f32.mrf.mxu0
      %v225 = vadd.f32 %v156, %v224
      %v226 = vpop.f32.mrf.mxu0
      %227 = vdwg.mxu0
      %v228 = vmax.f32 %v225, 0.0
      %229 = vst [vmem:[#allocation8] sm:$0xff] %v228
    $region29: #{tpu_custom_call.1} parent=1 // pred_fallthru
      _
    // Predicated region
    $region30: #{tpu_custom_call.1} parent=1 // pred_check
      _
    $region31: #{tpu_custom_call.1} parent=1 // pred_check_branch
      %231 = sbr.rel (0) target = $region33
    $region32: #{tpu_custom_call.1} parent=1 // pred_region
      %s233 = ssub.s32 128, 128
      %234 = vsyncadd [#allocation5], %s233
      %s236 = sshll.u32 [#allocation8], 4
      %s237 = int_to_ptr.vmem [resolvable:$true] %s236
      %239 = dma.vmem_to_hbm [thread:$0]  %s237, 128, %s3, [#allocation5]
    $region33: #{tpu_custom_call.1} parent=1 // pred_fallthru
      _
    // Predicated region
    $region34: #{tpu_custom_call.1} parent=1 // pred_check
      _
    $region35: #{tpu_custom_call.1} parent=1 // pred_check_branch
      %241 = sbr.rel (0) target = $region37
    $region36: #{tpu_custom_call.1} parent=1 // pred_region
      %242 = dma.done [#allocation5], 128
    $region37: #{tpu_custom_call.1} parent=1 // pred_fallthru
      _
    %243 = vsyncpa [#allocation4], 1
    %244 = vsyncpa [#allocation7], 1
    %245 = vsyncpa [#allocation5], 1

</llo_original>
